<compile_context>
chip_gen: v5e
topology: v5e:2x2
jax: 0.10.0
libtpu: 0.0.40
codegen_flags: <defaults>
</compile_context>

<pallas_src>
import functools

import jax
import jax.numpy as jnp
from jax import lax
from jax.experimental import pallas as pl
from jax.experimental.pallas import tpu as pltpu

BN_EPS = 1e-5
LANE = 128


def _round_up(x, m):
    return (x + m - 1) // m * m


def _pad_last(a, target):
    pad = target - a.shape[-1]
    if pad == 0:
        return a
    return jnp.pad(a, [(0, 0)] * (a.ndim - 1) + [(0, pad)])


# --------------------------------------------------------------------------- #
# Kernel
# --------------------------------------------------------------------------- #
def down_kernel(xp_ref, w1_ref, b1_ref, g1_ref, be1_ref,
                w2_ref, b2_ref, g2_ref, be2_ref, o_ref, *,
                seg_len, c_in_p):
    """Fused AvgPool1d(2) -> Conv1d(k3) -> BN -> ReLU -> Conv1d(k3) -> BN -> ReLU.

    xp_ref : (M, 2*C_in_pad)  even/odd L positions packed side-by-side in lanes
    w*_ref : (3*C_pad, C_pad) conv weights, 3 taps stacked on the contraction axis
    b/g/be : (1, C_pad)       conv bias, BN gamma, BN beta (f32)
    o_ref  : (M, C_out_pad)   lane-dense output, M = N * L/2
    """
    m = o_ref.shape[0]
    f32 = jnp.float32

    # ---- AvgPool1d(kernel_size=2, stride=2): a single VPU add, no matmul ----
    xp = xp_ref[...]
    x_pool = 0.5 * (xp[:, :c_in_p].astype(f32) + xp[:, c_in_p:].astype(f32))

    # ---- Segment-boundary masks (hoisted once, shared by both convs) --------
    # Rows of one sample are contiguous (seg_len rows each); the conv's zero
    # padding is realized by zeroing shifted rows that crossed a sample boundary.
    pos = lax.broadcasted_iota(jnp.int32, (m, 1), 0) % seg_len
    first_row = pos == 0
    last_row = pos == (seg_len - 1)

    def conv_k3(h, w_ref, bias):
        # Row shifts on the XLU (pltpu.roll) instead of (M, M) shift matmuls.
        w = w_ref[...]
        h_prev = jnp.where(first_row, 0.0, pltpu.roll(h, 1, axis=0))       # h[r-1]
        h_next = jnp.where(last_row, 0.0, pltpu.roll(h, m - 1, axis=0))    # h[r+1]
        taps = jnp.concatenate([h_prev, h, h_next], axis=1)                # (M, 3*C)
        taps = taps.astype(w.dtype)                                        # bf16 MXU operands
        return jnp.dot(taps, w, preferred_element_type=f32) + bias         # one MXU call

    def bn_relu(h, gamma, beta):
        # Training-mode BatchNorm1d over all rows (= N * L/2), f32 statistics.
        mean = jnp.mean(h, axis=0, keepdims=True)
        var = jnp.mean(jnp.square(h - mean), axis=0, keepdims=True)        # biased var
        out = (h - mean) * lax.rsqrt(var + BN_EPS) * gamma + beta
        return jnp.maximum(out, 0.0)

    h = conv_k3(x_pool, w1_ref, b1_ref[...])
    h = bn_relu(h, g1_ref[...], be1_ref[...])
    h = conv_k3(h, w2_ref, b2_ref[...])
    h = bn_relu(h, g2_ref[...], be2_ref[...])            # outer F.relu of DoubleConv

    o_ref[...] = h.astype(o_ref.dtype)


# --------------------------------------------------------------------------- #
# Wrapper
# --------------------------------------------------------------------------- #
def _pack_conv_weight(w_kio, c_in_p, c_out_p, dtype):
    # (3, C_in, C_out) -> (3*C_in_pad, C_out_pad), taps stacked on the K axis.
    k, c_in, c_out = w_kio.shape
    w = jnp.zeros((k, c_in_p, c_out_p), jnp.float32).at[:, :c_in, :c_out].set(w_kio)
    return w.reshape(k * c_in_p, c_out_p).astype(dtype)


def down_forward(x_ncl, params, *, matmul_dtype=jnp.bfloat16):
    """x_ncl: (N, C_in, L) like PyTorch Conv1d input. Returns (N, C_out, L//2)."""
    n, c_in, l = x_ncl.shape
    assert l % 2 == 0, "AvgPool1d(2) path here assumes even L"
    l2 = l // 2
    c_mid = params["w1"].shape[-1]
    c_out = params["w2"].shape[-1]
    c_in_p, c_mid_p, c_out_p = (_round_up(c, LANE) for c in (c_in, c_mid, c_out))
    m = n * l2

    # Layout plumbing: NCL -> (N*L/2, 2*C_in_pad).  Even/odd L positions land in
    # adjacent 128-lane blocks, so the kernel's pool is a lane-aligned slice+add.
    x_nlc = _pad_last(jnp.transpose(x_ncl, (0, 2, 1)), c_in_p)        # (N, L, Cp)
    x_pairs = x_nlc.reshape(n, l2, 2 * c_in_p).reshape(m, 2 * c_in_p)

    w1 = _pack_conv_weight(params["w1"], c_in_p, c_mid_p, matmul_dtype)
    w2 = _pack_conv_weight(params["w2"], c_mid_p, c_out_p, matmul_dtype)
    b1, g1, be1 = (_pad_last(params[k], c_mid_p) for k in ("b1", "g1", "be1"))
    b2, g2, be2 = (_pad_last(params[k], c_out_p) for k in ("b2", "g2", "be2"))

    vmem = pl.BlockSpec(memory_space=pltpu.MemorySpace.VMEM)
    kernel = functools.partial(down_kernel, seg_len=l2, c_in_p=c_in_p)

    out_rows = pl.pallas_call(
        kernel,
        out_shape=jax.ShapeDtypeStruct((m, c_out_p), x_ncl.dtype),
        in_specs=[vmem] * 9,
        out_specs=vmem,
        compiler_params=pltpu.CompilerParams(vmem_limit_bytes=48 * 1024 * 1024),
    )(x_pairs, w1, b1, g1, be1, w2, b2, g2, be2)

    # (N*L2, C_out_pad) -> (N, C_out, L//2)  (PyTorch NCL)
    return jnp.transpose(out_rows[:, :c_out].reshape(n, l2, c_out), (0, 2, 1))


# --------------------------------------------------------------------------- #
# Params (matches module __init__: conv weight ~ N(0, 0.02), bias 0, BN defaults)
# --------------------------------------------------------------------------- #
def init_params(key, c_in, c_out):
    c_mid = c_out
    k1, k2 = jax.random.split(key)
    return {
        # conv weights stored as (kernel=3, C_in, C_out)
        "w1": (0.02 * jax.random.normal(k1, (3, c_in, c_mid))).astype(jnp.float32),
        "b1": jnp.zeros((1, c_mid), jnp.float32),
        "g1": jnp.ones((1, c_mid), jnp.float32),
        "be1": jnp.zeros((1, c_mid), jnp.float32),
        "w2": (0.02 * jax.random.normal(k2, (3, c_mid, c_out))).astype(jnp.float32),
        "b2": jnp.zeros((1, c_out), jnp.float32),
        "g2": jnp.ones((1, c_out), jnp.float32),
        "be2": jnp.zeros((1, c_out), jnp.float32),
    }


# --------------------------------------------------------------------------- #
# Pure-JAX reference (mirrors the PyTorch module's training-mode forward)
# --------------------------------------------------------------------------- #
def _conv1d_k3_ref(x_ncl, w_kio, b):
    xp = jnp.pad(x_ncl, ((0, 0), (0, 0), (1, 1)))
    taps = jnp.stack([xp[:, :, k:k + x_ncl.shape[-1]] for k in range(3)], axis=0)
    out = jnp.einsum("knil,kio->nol", taps, w_kio,
                     precision=jax.lax.Precision.HIGHEST)
    return out + b[None, :, None]


def _bn_relu_ref(x_ncl, g, be):
    mean = jnp.mean(x_ncl, axis=(0, 2), keepdims=True)
    var = jnp.mean(jnp.square(x_ncl - mean), axis=(0, 2), keepdims=True)
    out = (x_ncl - mean) * lax.rsqrt(var + BN_EPS) * g[None, :, None] + be[None, :, None]
    return jnp.maximum(out, 0.0)


def down_reference(x_ncl, params):
    n, c, l = x_ncl.shape
    x = x_ncl.reshape(n, c, l // 2, 2).mean(axis=-1)          # AvgPool1d(2)
    h = _conv1d_k3_ref(x, params["w1"], params["b1"][0])
    h = _bn_relu_ref(h, params["g1"][0], params["be1"][0])
    h = _conv1d_k3_ref(h, params["w2"], params["b2"][0])
    h = _bn_relu_ref(h, params["g2"][0], params["be2"][0])
    return h


if __name__ == "__main__":
    key = jax.random.PRNGKey(0)
    kx, kp = jax.random.split(key)

    N, C_IN, C_OUT, L = 2, 4, 8, 16
    x = jax.random.normal(kx, (N, C_IN, L), dtype=jnp.float32)   # PyTorch NCL layout
    params = init_params(kp, C_IN, C_OUT)

    out = jax.block_until_ready(down_forward(x, params))
    assert out.shape == (N, C_OUT, L // 2), out.shape
    assert bool(jnp.all(jnp.isfinite(out)))

    # Numerical check vs. f32 reference (loose tolerance: bf16 MXU operands).
    ref = down_reference(x, params)
    max_err = float(jnp.max(jnp.abs(out - ref)))
    assert bool(jnp.allclose(out, ref, rtol=1e-1, atol=1e-1)), max_err

    print("KERNEL_OK")
</pallas_src>

<mosaic_0001>
module attributes {stable_mosaic.version = 11 : i64} {
  func.func @down_kernel(%arg0: memref<16x256xf32, #tpu.memory_space<vmem>>, %arg1: memref<384x128xbf16, #tpu.memory_space<vmem>>, %arg2: memref<1x128xf32, #tpu.memory_space<vmem>>, %arg3: memref<1x128xf32, #tpu.memory_space<vmem>>, %arg4: memref<1x128xf32, #tpu.memory_space<vmem>>, %arg5: memref<384x128xbf16, #tpu.memory_space<vmem>>, %arg6: memref<1x128xf32, #tpu.memory_space<vmem>>, %arg7: memref<1x128xf32, #tpu.memory_space<vmem>>, %arg8: memref<1x128xf32, #tpu.memory_space<vmem>>, %arg9: memref<16x128xf32, #tpu.memory_space<vmem>>) attributes {dimension_semantics = [], scalar_prefetch = 0 : i64, scratch_operands = 0 : i64, tpu.core_type = #tpu.core_type<tc>} {
    %c0 = arith.constant 0 : index
    %c0_0 = arith.constant 0 : index
    %0 = vector.load %arg0[%c0, %c0_0] : memref<16x256xf32, #tpu.memory_space<vmem>>, vector<16x256xf32>
    %1 = vector.extract_strided_slice %0 {offsets = [0, 0], sizes = [16, 128], strides = [1, 1]} : vector<16x256xf32> to vector<16x128xf32>
    %2 = vector.extract_strided_slice %0 {offsets = [0, 128], sizes = [16, 128], strides = [1, 1]} : vector<16x256xf32> to vector<16x128xf32>
    %3 = arith.addf %1, %2 : vector<16x128xf32>
    %cst = arith.constant 5.000000e-01 : f32
    %4 = vector.broadcast %cst : f32 to vector<16x128xf32>
    %5 = arith.mulf %4, %3 : vector<16x128xf32>
    %6 = tpu.iota {dimensions = array<i32: 0>} : vector<16x1xi32>
    %c8_i32 = arith.constant 8 : i32
    %c0_i32 = arith.constant 0 : i32
    %7 = arith.cmpi eq, %c8_i32, %c0_i32 : i32
    %c1_i32 = arith.constant 1 : i32
    %8 = arith.select %7, %c1_i32, %c8_i32 : i32
    %9 = vector.broadcast %8 : i32 to vector<16x1xi32>
    %10 = arith.remsi %6, %9 : vector<16x1xi32>
    %c0_i32_1 = arith.constant 0 : i32
    %11 = vector.broadcast %c0_i32_1 : i32 to vector<16x1xi32>
    %12 = arith.cmpi ne, %10, %11 : vector<16x1xi32>
    %c0_i32_2 = arith.constant 0 : i32
    %13 = vector.broadcast %c0_i32_2 : i32 to vector<16x1xi32>
    %14 = arith.cmpi slt, %10, %13 : vector<16x1xi32>
    %c0_i32_3 = arith.constant 0 : i32
    %15 = arith.cmpi slt, %8, %c0_i32_3 : i32
    %16 = vector.broadcast %15 : i1 to vector<16x1xi1>
    %17 = vector.broadcast %16 : vector<16x1xi1> to vector<16x1xi1>
    %18 = arith.xori %14, %17 : vector<16x1xi1>
    %19 = arith.andi %18, %12 : vector<16x1xi1>
    %20 = vector.broadcast %8 : i32 to vector<16x1xi32>
    %21 = arith.addi %10, %20 : vector<16x1xi32>
    %22 = arith.select %19, %21, %10 : vector<16x1xi1>, vector<16x1xi32>
    %c0_i32_4 = arith.constant 0 : i32
    %23 = vector.broadcast %c0_i32_4 : i32 to vector<16x1xi32>
    %24 = arith.cmpi eq, %22, %23 : vector<16x1xi32>
    %c7_i32 = arith.constant 7 : i32
    %25 = vector.broadcast %c7_i32 : i32 to vector<16x1xi32>
    %26 = arith.cmpi eq, %22, %25 : vector<16x1xi32>
    %c0_5 = arith.constant 0 : index
    %c0_6 = arith.constant 0 : index
    %27 = vector.load %arg2[%c0_5, %c0_6] : memref<1x128xf32, #tpu.memory_space<vmem>>, vector<1x128xf32>
    %c0_7 = arith.constant 0 : index
    %c0_8 = arith.constant 0 : index
    %28 = vector.load %arg1[%c0_7, %c0_8] : memref<384x128xbf16, #tpu.memory_space<vmem>>, vector<384x128xbf16>
    %c1_i32_9 = arith.constant 1 : i32
    %29 = tpu.dynamic_rotate %5 by %c1_i32_9 dim 0 : vector<16x128xf32>, i32 -> vector<16x128xf32>
    %cst_10 = arith.constant 0.000000e+00 : f32
    %30 = vector.shape_cast %24 : vector<16x1xi1> to vector<16x1xi1>
    %31 = vector.broadcast %30 : vector<16x1xi1> to vector<16x128xi1>
    %32 = vector.broadcast %cst_10 : f32 to vector<16x128xf32>
    %33 = arith.select %31, %32, %29 : vector<16x128xi1>, vector<16x128xf32>
    %c15_i32 = arith.constant 15 : i32
    %34 = tpu.dynamic_rotate %5 by %c15_i32 dim 0 : vector<16x128xf32>, i32 -> vector<16x128xf32>
    %cst_11 = arith.constant 0.000000e+00 : f32
    %35 = vector.shape_cast %26 : vector<16x1xi1> to vector<16x1xi1>
    %36 = vector.broadcast %35 : vector<16x1xi1> to vector<16x128xi1>
    %37 = vector.broadcast %cst_11 : f32 to vector<16x128xf32>
    %38 = arith.select %36, %37, %34 : vector<16x128xi1>, vector<16x128xf32>
    %39 = tpu.concatenate %33, %5, %38 in 1 : vector<16x128xf32>, vector<16x128xf32>, vector<16x128xf32> -> vector<16x384xf32>
    %40 = arith.truncf %39 : vector<16x384xf32> to vector<16x384xbf16>
    %cst_12 = arith.constant dense<0.000000e+00> : vector<16x128xf32>
    %41 = tpu.matmul %40, %28, %cst_12 {dimension_numbers = #tpu.dot_dimension_numbers<[1], [0], [0], [1], [0, 0, 1, 1], [], []>} : vector<16x384xbf16>, vector<384x128xbf16>, vector<16x128xf32> -> vector<16x128xf32>
    %42 = vector.broadcast %27 : vector<1x128xf32> to vector<16x128xf32>
    %43 = arith.addf %41, %42 : vector<16x128xf32>
    %c0_13 = arith.constant 0 : index
    %c0_14 = arith.constant 0 : index
    %44 = vector.load %arg3[%c0_13, %c0_14] : memref<1x128xf32, #tpu.memory_space<vmem>>, vector<1x128xf32>
    %c0_15 = arith.constant 0 : index
    %c0_16 = arith.constant 0 : index
    %45 = vector.load %arg4[%c0_15, %c0_16] : memref<1x128xf32, #tpu.memory_space<vmem>>, vector<1x128xf32>
    %cst_17 = arith.constant dense<0.000000e+00> : vector<128xf32>
    %46 = vector.multi_reduction <add>, %43, %cst_17 [0] : vector<16x128xf32> to vector<128xf32>
    %47 = vector.shape_cast %46 : vector<128xf32> to vector<1x128xf32>
    %cst_18 = arith.constant 1.600000e+01 : f32
    %48 = vector.broadcast %cst_18 : f32 to vector<1x128xf32>
    %49 = arith.divf %47, %48 : vector<1x128xf32>
    %50 = vector.broadcast %49 : vector<1x128xf32> to vector<16x128xf32>
    %51 = arith.subf %43, %50 : vector<16x128xf32>
    %52 = arith.mulf %51, %51 : vector<16x128xf32>
    %cst_19 = arith.constant dense<0.000000e+00> : vector<128xf32>
    %53 = vector.multi_reduction <add>, %52, %cst_19 [0] : vector<16x128xf32> to vector<128xf32>
    %54 = vector.shape_cast %53 : vector<128xf32> to vector<1x128xf32>
    %cst_20 = arith.constant 1.600000e+01 : f32
    %55 = vector.broadcast %cst_20 : f32 to vector<1x128xf32>
    %56 = arith.divf %54, %55 : vector<1x128xf32>
    %57 = vector.broadcast %49 : vector<1x128xf32> to vector<16x128xf32>
    %58 = arith.subf %43, %57 : vector<16x128xf32>
    %cst_21 = arith.constant 9.99999974E-6 : f32
    %59 = vector.broadcast %cst_21 : f32 to vector<1x128xf32>
    %60 = arith.addf %56, %59 : vector<1x128xf32>
    %61 = math.rsqrt %60 : vector<1x128xf32>
    %62 = vector.broadcast %61 : vector<1x128xf32> to vector<16x128xf32>
    %63 = arith.mulf %58, %62 : vector<16x128xf32>
    %64 = vector.broadcast %44 : vector<1x128xf32> to vector<16x128xf32>
    %65 = arith.mulf %63, %64 : vector<16x128xf32>
    %66 = vector.broadcast %45 : vector<1x128xf32> to vector<16x128xf32>
    %67 = arith.addf %65, %66 : vector<16x128xf32>
    %cst_22 = arith.constant 0.000000e+00 : f32
    %68 = vector.broadcast %cst_22 : f32 to vector<16x128xf32>
    %69 = arith.maximumf %67, %68 : vector<16x128xf32>
    %c0_23 = arith.constant 0 : index
    %c0_24 = arith.constant 0 : index
    %70 = vector.load %arg6[%c0_23, %c0_24] : memref<1x128xf32, #tpu.memory_space<vmem>>, vector<1x128xf32>
    %c0_25 = arith.constant 0 : index
    %c0_26 = arith.constant 0 : index
    %71 = vector.load %arg5[%c0_25, %c0_26] : memref<384x128xbf16, #tpu.memory_space<vmem>>, vector<384x128xbf16>
    %c1_i32_27 = arith.constant 1 : i32
    %72 = tpu.dynamic_rotate %69 by %c1_i32_27 dim 0 : vector<16x128xf32>, i32 -> vector<16x128xf32>
    %cst_28 = arith.constant 0.000000e+00 : f32
    %73 = vector.shape_cast %24 : vector<16x1xi1> to vector<16x1xi1>
    %74 = vector.broadcast %73 : vector<16x1xi1> to vector<16x128xi1>
    %75 = vector.broadcast %cst_28 : f32 to vector<16x128xf32>
    %76 = arith.select %74, %75, %72 : vector<16x128xi1>, vector<16x128xf32>
    %c15_i32_29 = arith.constant 15 : i32
    %77 = tpu.dynamic_rotate %69 by %c15_i32_29 dim 0 : vector<16x128xf32>, i32 -> vector<16x128xf32>
    %cst_30 = arith.constant 0.000000e+00 : f32
    %78 = vector.shape_cast %26 : vector<16x1xi1> to vector<16x1xi1>
    %79 = vector.broadcast %78 : vector<16x1xi1> to vector<16x128xi1>
    %80 = vector.broadcast %cst_30 : f32 to vector<16x128xf32>
    %81 = arith.select %79, %80, %77 : vector<16x128xi1>, vector<16x128xf32>
    %82 = tpu.concatenate %76, %69, %81 in 1 : vector<16x128xf32>, vector<16x128xf32>, vector<16x128xf32> -> vector<16x384xf32>
    %83 = arith.truncf %82 : vector<16x384xf32> to vector<16x384xbf16>
    %cst_31 = arith.constant dense<0.000000e+00> : vector<16x128xf32>
    %84 = tpu.matmul %83, %71, %cst_31 {dimension_numbers = #tpu.dot_dimension_numbers<[1], [0], [0], [1], [0, 0, 1, 1], [], []>} : vector<16x384xbf16>, vector<384x128xbf16>, vector<16x128xf32> -> vector<16x128xf32>
    %85 = vector.broadcast %70 : vector<1x128xf32> to vector<16x128xf32>
    %86 = arith.addf %84, %85 : vector<16x128xf32>
    %c0_32 = arith.constant 0 : index
    %c0_33 = arith.constant 0 : index
    %87 = vector.load %arg7[%c0_32, %c0_33] : memref<1x128xf32, #tpu.memory_space<vmem>>, vector<1x128xf32>
    %c0_34 = arith.constant 0 : index
    %c0_35 = arith.constant 0 : index
    %88 = vector.load %arg8[%c0_34, %c0_35] : memref<1x128xf32, #tpu.memory_space<vmem>>, vector<1x128xf32>
    %cst_36 = arith.constant dense<0.000000e+00> : vector<128xf32>
    %89 = vector.multi_reduction <add>, %86, %cst_36 [0] : vector<16x128xf32> to vector<128xf32>
    %90 = vector.shape_cast %89 : vector<128xf32> to vector<1x128xf32>
    %cst_37 = arith.constant 1.600000e+01 : f32
    %91 = vector.broadcast %cst_37 : f32 to vector<1x128xf32>
    %92 = arith.divf %90, %91 : vector<1x128xf32>
    %93 = vector.broadcast %92 : vector<1x128xf32> to vector<16x128xf32>
    %94 = arith.subf %86, %93 : vector<16x128xf32>
    %95 = arith.mulf %94, %94 : vector<16x128xf32>
    %cst_38 = arith.constant dense<0.000000e+00> : vector<128xf32>
    %96 = vector.multi_reduction <add>, %95, %cst_38 [0] : vector<16x128xf32> to vector<128xf32>
    %97 = vector.shape_cast %96 : vector<128xf32> to vector<1x128xf32>
    %cst_39 = arith.constant 1.600000e+01 : f32
    %98 = vector.broadcast %cst_39 : f32 to vector<1x128xf32>
    %99 = arith.divf %97, %98 : vector<1x128xf32>
    %100 = vector.broadcast %92 : vector<1x128xf32> to vector<16x128xf32>
    %101 = arith.subf %86, %100 : vector<16x128xf32>
    %cst_40 = arith.constant 9.99999974E-6 : f32
    %102 = vector.broadcast %cst_40 : f32 to vector<1x128xf32>
    %103 = arith.addf %99, %102 : vector<1x128xf32>
    %104 = math.rsqrt %103 : vector<1x128xf32>
    %105 = vector.broadcast %104 : vector<1x128xf32> to vector<16x128xf32>
    %106 = arith.mulf %101, %105 : vector<16x128xf32>
    %107 = vector.broadcast %87 : vector<1x128xf32> to vector<16x128xf32>
    %108 = arith.mulf %106, %107 : vector<16x128xf32>
    %109 = vector.broadcast %88 : vector<1x128xf32> to vector<16x128xf32>
    %110 = arith.addf %108, %109 : vector<16x128xf32>
    %cst_41 = arith.constant 0.000000e+00 : f32
    %111 = vector.broadcast %cst_41 : f32 to vector<16x128xf32>
    %112 = arith.maximumf %110, %111 : vector<16x128xf32>
    %c0_42 = arith.constant 0 : index
    %c0_43 = arith.constant 0 : index
    %113 = vector.load %arg9[%c0_42, %c0_43] : memref<16x128xf32, #tpu.memory_space<vmem>>, vector<16x128xf32>
    tpu.vector_store %arg9[%c0_42, %c0_43], %112 {strides = array<i32>} : memref<16x128xf32, #tpu.memory_space<vmem>>, vector<16x128xf32>,
    return
  }
}

</mosaic_0001>

<llo_original>
// kernel: tpu_custom_call.1
$region0: #{tpu_custom_call.1}
  #allocation0 [shape = 'u32[]', space=smem, size = 0x4, offset = 0x4, fixed_abs, tag = 'smem constant byte address 0x4 - core index']
  #allocation1 [shape = 'u32[72,128]{1,0:T(1,128)}', space=vmem, size = 0x9000, scoped, tag = 'internal scratch']
  %s0 = inlined_call_operand.hbm [shape: f32[16,256], index: 0, kind: input, shape index: {}]
  %s1 = inlined_call_operand.hbm [shape: bf16[384,128], index: 1, kind: input, shape index: {}]
  %s2 = inlined_call_operand.vmem [shape: f32[1,128], index: 2, kind: input, shape index: {}]
  %s3 = inlined_call_operand.vmem [shape: f32[1,128], index: 3, kind: input, shape index: {}]
  %s4 = inlined_call_operand.vmem [shape: f32[1,128], index: 4, kind: input, shape index: {}]
  %s5 = inlined_call_operand.hbm [shape: bf16[384,128], index: 5, kind: input, shape index: {}]
  %s6 = inlined_call_operand.vmem [shape: f32[1,128], index: 6, kind: input, shape index: {}]
  %s7 = inlined_call_operand.vmem [shape: f32[1,128], index: 7, kind: input, shape index: {}]
  %s8 = inlined_call_operand.vmem [shape: f32[1,128], index: 8, kind: input, shape index: {}]
  %s9 = inlined_call_operand.hbm [shape: f32[16,128], index: 9, kind: output, shape index: {}]
  %s10 = sld [smem:[#allocation0]]
  $region58: #{tpu_custom_call.1} parent=0
    _
  %s12 = ssub.s32 1, %s10
  %s13 = scalar_select 0, %s12, %s10
  $region1: #{tpu_custom_call.1} parent=0
    #allocation2 [shape = 'u8[16384]{0}', space=vmem, size = 0x4000, scoped, tag = 'input window, operand 0, single buffered']
    #allocation3 [shape = 's32[1]{0}', space=sflag, size = 0x4, scoped, tag = 'scoped memory for tpu_custom_call.1']
    #allocation4 [shape = 's32[1]{0}', space=sflag, size = 0x4, scoped, tag = 'scoped memory for tpu_custom_call.1']
    #allocation5 [shape = 'u8[98304]{0}', space=vmem, size = 0x18000, scoped, tag = 'input window, operand 1, single buffered']
    #allocation6 [shape = 's32[1]{0}', space=sflag, size = 0x4, scoped, tag = 'scoped memory for tpu_custom_call.1']
    #allocation7 [shape = 'u8[98304]{0}', space=vmem, size = 0x18000, scoped, tag = 'input window, operand 5, single buffered']
    #allocation8 [shape = 'u8[8192]{0}', space=vmem, size = 0x2000, scoped, tag = 'output window, operand 0, single buffered']
    %14 = vsyncpa [#allocation3], 0
    %15 = vsyncpa [#allocation6], 0
    %16 = vsyncpa [#allocation4], 0
    // Predicated region
    $region2: #{tpu_custom_call.1} parent=1 // pred_check
      _
    $region3: #{tpu_custom_call.1} parent=1 // pred_check_branch
      %18 = sbr.rel (0) target = $region5
    $region4: #{tpu_custom_call.1} parent=1 // pred_region
      %20 = vsyncadd [#allocation3], 0
      %s21 = sshll.u32 %s0, 4
      %s22 = int_to_ptr.hbm [resolvable:$true] %s21
      %s23 = sshll.u32 [#allocation2], 4
      %s24 = int_to_ptr.vmem [resolvable:$true] %s23
      %29 = dma.hbm_to_vmem [thread:$0]  %s22, 512, %s24, [#allocation3], 256, 256, 16
    $region5: #{tpu_custom_call.1} parent=1 // pred_fallthru
      _
    // Predicated region
    $region6: #{tpu_custom_call.1} parent=1 // pred_check
      _
    $region7: #{tpu_custom_call.1} parent=1 // pred_check_branch
      %31 = sbr.rel (0) target = $region9
    $region8: #{tpu_custom_call.1} parent=1 // pred_region
      %33 = vsyncadd [#allocation6], 0
      %s34 = sshll.u32 %s1, 4
      %s35 = int_to_ptr.hbm [resolvable:$true] %s34
      %s36 = sshll.u32 [#allocation5], 4
      %s37 = int_to_ptr.vmem [resolvable:$true] %s36
      %42 = dma.hbm_to_vmem [thread:$0]  %s35, 3072, %s37, [#allocation6], 64, 64, 4
    $region9: #{tpu_custom_call.1} parent=1 // pred_fallthru
      _
    // Predicated region
    $region10: #{tpu_custom_call.1} parent=1 // pred_check
      _
    $region11: #{tpu_custom_call.1} parent=1 // pred_check_branch
      %44 = sbr.rel (0) target = $region13
    $region12: #{tpu_custom_call.1} parent=1 // pred_region
      _
    $region13: #{tpu_custom_call.1} parent=1 // pred_fallthru
      _
    // Predicated region
    $region14: #{tpu_custom_call.1} parent=1 // pred_check
      _
    $region15: #{tpu_custom_call.1} parent=1 // pred_check_branch
      %46 = sbr.rel (0) target = $region17
    $region16: #{tpu_custom_call.1} parent=1 // pred_region
      _
    $region17: #{tpu_custom_call.1} parent=1 // pred_fallthru
      _
    // Predicated region
    $region18: #{tpu_custom_call.1} parent=1 // pred_check
      _
    $region19: #{tpu_custom_call.1} parent=1 // pred_check_branch
      %48 = sbr.rel (0) target = $region21
    $region20: #{tpu_custom_call.1} parent=1 // pred_region
      _
    $region21: #{tpu_custom_call.1} parent=1 // pred_fallthru
      _
    // Predicated region
    $region22: #{tpu_custom_call.1} parent=1 // pred_check
      _
    $region23: #{tpu_custom_call.1} parent=1 // pred_check_branch
      %50 = sbr.rel (0) target = $region25
    $region24: #{tpu_custom_call.1} parent=1 // pred_region
      %52 = vsyncadd [#allocation6], 0
      %s53 = sshll.u32 %s5, 4
      %s54 = int_to_ptr.hbm [resolvable:$true] %s53
      %s55 = sshll.u32 [#allocation7], 4
      %s56 = int_to_ptr.vmem [resolvable:$true] %s55
      %61 = dma.hbm_to_vmem [thread:$0]  %s54, 3072, %s56, [#allocation6], 64, 64, 4
    $region25: #{tpu_custom_call.1} parent=1 // pred_fallthru
      _
    // Predicated region
    $region26: #{tpu_custom_call.1} parent=1 // pred_check
      _
    $region27: #{tpu_custom_call.1} parent=1 // pred_check_branch
      %63 = sbr.rel (0) target = $region29
    $region28: #{tpu_custom_call.1} parent=1 // pred_region
      _
    $region29: #{tpu_custom_call.1} parent=1 // pred_fallthru
      _
    // Predicated region
    $region30: #{tpu_custom_call.1} parent=1 // pred_check
      _
    $region31: #{tpu_custom_call.1} parent=1 // pred_check_branch
      %65 = sbr.rel (0) target = $region33
    $region32: #{tpu_custom_call.1} parent=1 // pred_region
      _
    $region33: #{tpu_custom_call.1} parent=1 // pred_fallthru
      _
    // Predicated region
    $region34: #{tpu_custom_call.1} parent=1 // pred_check
      _
    $region35: #{tpu_custom_call.1} parent=1 // pred_check_branch
      %67 = sbr.rel (0) target = $region37
    $region36: #{tpu_custom_call.1} parent=1 // pred_region
      _
    $region37: #{tpu_custom_call.1} parent=1 // pred_fallthru
      _
    // Predicated region
    $region38: #{tpu_custom_call.1} parent=1 // pred_check
      _
    $region39: #{tpu_custom_call.1} parent=1 // pred_check_branch
      %69 = sbr.rel (0) target = $region41
    $region40: #{tpu_custom_call.1} parent=1 // pred_region
      %71 = dma.done [#allocation3], 512
    $region41: #{tpu_custom_call.1} parent=1 // pred_fallthru
      _
    // Predicated region
    $region42: #{tpu_custom_call.1} parent=1 // pred_check
      _
    $region43: #{tpu_custom_call.1} parent=1 // pred_check_branch
      %73 = sbr.rel (0) target = $region45
    $region44: #{tpu_custom_call.1} parent=1 // pred_region
      %75 = dma.done [#allocation6], 3072
    $region45: #{tpu_custom_call.1} parent=1 // pred_fallthru
      _
    // Predicated region
    $region46: #{tpu_custom_call.1} parent=1 // pred_check
      _
    $region47: #{tpu_custom_call.1} parent=1 // pred_check_branch
      %77 = sbr.rel (0) target = $region49
    $region48: #{tpu_custom_call.1} parent=1 // pred_region
      %79 = dma.done [#allocation6], 3072
    $region49: #{tpu_custom_call.1} parent=1 // pred_fallthru
      _
    %v80 = vld [vmem:[#allocation2] sm:$0xff]
    %v81 = vld [vmem:[#allocation2 + $0x8] sm:$0xff]
    %v82 = vld [vmem:[#allocation2 + $0x10] sm:$0xff]
    %v83 = vld [vmem:[#allocation2 + $0x18] sm:$0xff]
    %v84 = vadd.f32 %v80, %v81
    %v85 = vadd.f32 %v82, %v83
    %v86 = vmul.f32 %v84, 0.5
    %v87 = vmul.f32 %v85, 0.5
    %v88 = vlaneseq
    %v89 = vshrl.u32 %v88, 7
    %v90 = vadd.s32 %v89, 8
    %vm91 = vcmp.lt.s32.totalorder %v89, 0
    %v92 = vsub.s32 0, %v89
    %v93 = vsel %vm91, %v92, %v89
    %v94 = vshrl.u32 %v93, 3
    %v95 = vand.u32 %v93, 7
    %v96 = vsub.s32 0, %v95
    %v97 = vsel %vm91, %v96, %v95
    %vm98 = vcmp.lt.s32.totalorder %v90, 0
    %v99 = vsub.s32 0, %v90
    %v100 = vsel %vm98, %v99, %v90
    %v101 = vshrl.u32 %v100, 3
    %v102 = vand.u32 %v100, 7
    %v103 = vsub.s32 0, %v102
    %v104 = vsel %vm98, %v103, %v102
    %vm105 = vcmp.ne.s32.totalorder %v97, 0
    %vm106 = vcmp.ne.s32.totalorder %v104, 0
    %vm107 = vcmp.lt.s32.totalorder %v97, 0
    %vm108 = vcmp.lt.s32.totalorder %v104, 0
    %vm109 = vmand %vm107, %vm105
    %vm110 = vmand %vm108, %vm106
    %v111 = vadd.s32 %v97, 8
    %v112 = vadd.s32 %v104, 8
    %v113 = vsel %vm109, %v111, %v97
    %v114 = vsel %vm110, %v112, %v104
    %vm115 = vcmp.eq.s32.totalorder %v113, 0
    %vm116 = vcmp.eq.s32.totalorder %v114, 0
    %vm117 = vcmp.eq.s32.totalorder %v113, 7
    %vm118 = vcmp.eq.s32.totalorder %v114, 7
    %v119 = vld [vmem:[%s2] sm:$0x1]
    %v120 = vld [vmem:[#allocation5] sm:$0xf]
    %v121 = vld [vmem:[#allocation5 + $0x4] sm:$0xf]
    %v122 = vld [vmem:[#allocation5 + $0x8] sm:$0xf]
    %v123 = vld [vmem:[#allocation5 + $0xc] sm:$0xf]
    %v124 = vld [vmem:[#allocation5 + $0x10] sm:$0xf]
    %v125 = vld [vmem:[#allocation5 + $0x14] sm:$0xf]
    %v126 = vld [vmem:[#allocation5 + $0x18] sm:$0xf]
    %v127 = vld [vmem:[#allocation5 + $0x1c] sm:$0xf]
    %v128 = vld [vmem:[#allocation5 + $0x20] sm:$0xf]
    %v129 = vld [vmem:[#allocation5 + $0x24] sm:$0xf]
    %v130 = vld [vmem:[#allocation5 + $0x28] sm:$0xf]
    %v131 = vld [vmem:[#allocation5 + $0x2c] sm:$0xf]
    %v132 = vld [vmem:[#allocation5 + $0x30] sm:$0xf]
    %v133 = vld [vmem:[#allocation5 + $0x34] sm:$0xf]
    %v134 = vld [vmem:[#allocation5 + $0x38] sm:$0xf]
    %v135 = vld [vmem:[#allocation5 + $0x3c] sm:$0xf]
    %v136 = vld [vmem:[#allocation5 + $0x40] sm:$0xf]
    %v137 = vld [vmem:[#allocation5 + $0x44] sm:$0xf]
    %v138 = vld [vmem:[#allocation5 + $0x48] sm:$0xf]
    %v139 = vld [vmem:[#allocation5 + $0x4c] sm:$0xf]
    %v140 = vld [vmem:[#allocation5 + $0x50] sm:$0xf]
    %v141 = vld [vmem:[#allocation5 + $0x54] sm:$0xf]
    %v142 = vld [vmem:[#allocation5 + $0x58] sm:$0xf]
    %v143 = vld [vmem:[#allocation5 + $0x5c] sm:$0xf]
    %v144 = vld [vmem:[#allocation5 + $0x60] sm:$0xf]
    %v145 = vld [vmem:[#allocation5 + $0x64] sm:$0xf]
    %v146 = vld [vmem:[#allocation5 + $0x68] sm:$0xf]
    %v147 = vld [vmem:[#allocation5 + $0x6c] sm:$0xf]
    %v148 = vld [vmem:[#allocation5 + $0x70] sm:$0xf]
    %v149 = vld [vmem:[#allocation5 + $0x74] sm:$0xf]
    %v150 = vld [vmem:[#allocation5 + $0x78] sm:$0xf]
    %v151 = vld [vmem:[#allocation5 + $0x7c] sm:$0xf]
    %v152 = vld [vmem:[#allocation5 + $0x80] sm:$0xf]
    %v153 = vld [vmem:[#allocation5 + $0x84] sm:$0xf]
    %v154 = vld [vmem:[#allocation5 + $0x88] sm:$0xf]
    %v155 = vld [vmem:[#allocation5 + $0x8c] sm:$0xf]
    %v156 = vld [vmem:[#allocation5 + $0x90] sm:$0xf]
    %v157 = vld [vmem:[#allocation5 + $0x94] sm:$0xf]
    %v158 = vld [vmem:[#allocation5 + $0x98] sm:$0xf]
    %v159 = vld [vmem:[#allocation5 + $0x9c] sm:$0xf]
    %v160 = vld [vmem:[#allocation5 + $0xa0] sm:$0xf]
    %v161 = vld [vmem:[#allocation5 + $0xa4] sm:$0xf]
    %v162 = vld [vmem:[#allocation5 + $0xa8] sm:$0xf]
    %v163 = vld [vmem:[#allocation5 + $0xac] sm:$0xf]
    %v164 = vld [vmem:[#allocation5 + $0xb0] sm:$0xf]
    %v165 = vld [vmem:[#allocation5 + $0xb4] sm:$0xf]
    %v166 = vld [vmem:[#allocation5 + $0xb8] sm:$0xf]
    %v167 = vld [vmem:[#allocation5 + $0xbc] sm:$0xf]
    %v168 = vrot.slane %v86, 7
    %v169 = vrot.slane %v87, 7
    %vm170 = vcmp.lt.s32.totalorder %v89, 1
    %v171 = vsel %vm170, %v168, %v169
    %v172 = vsel %vm170, %v169, %v168
    %v173 = vsel %vm115, 1, 0
    %v174 = vsel %vm116, 1, 0
    %vm175 = vcmp.eq.s32.totalorder %v173, 1
    %vm176 = vcmp.eq.s32.totalorder %v174, 1
    %v177 = vsel %vm175, 0.0, %v172
    %v178 = vsel %vm176, 0.0, %v171
    %v179 = vrot.slane %v86, 1
    %v180 = vrot.slane %v87, 1
    %vm181 = vcmp.lt.s32.totalorder %v89, 7
    %v182 = vsel %vm181, %v179, %v180
    %v183 = vsel %vm181, %v180, %v179
    %v184 = vsel %vm117, 1, 0
    %v185 = vsel %vm118, 1, 0
    %vm186 = vcmp.eq.s32.totalorder %v184, 1
    %vm187 = vcmp.eq.s32.totalorder %v185, 1
    %v188 = vsel %vm186, 0.0, %v182
    %v189 = vsel %vm187, 0.0, %v183
    %v190 = vpack.c.bf16 %v178, %v177
    %v191 = vpack.c.bf16 %v87, %v86
    %v192 = vpack.c.bf16 %v189, %v188
    %v194 = vperm.slane %v119, 0
    %v244 = vunpack.c.l.b16 %v120
    %v245 = vunpack.c.l.b16 %v121
    %v246 = vunpack.c.l.b16 %v122
    %v247 = vunpack.c.l.b16 %v123
    %v248 = vunpack.c.l.b16 %v124
    %v249 = vunpack.c.l.b16 %v125
    %v250 = vunpack.c.l.b16 %v126
    %v251 = vunpack.c.l.b16 %v127
    %v252 = vunpack.c.l.b16 %v128
    %v253 = vunpack.c.l.b16 %v129
    %v254 = vunpack.c.l.b16 %v130
    %v255 = vunpack.c.l.b16 %v131
    %v256 = vunpack.c.l.b16 %v132
    %v257 = vunpack.c.l.b16 %v133
    %v258 = vunpack.c.l.b16 %v134
    %v259 = vunpack.c.l.b16 %v135
    %v260 = vunpack.c.l.b16 %v136
    %v261 = vunpack.c.l.b16 %v137
    %v262 = vunpack.c.l.b16 %v138
    %v263 = vunpack.c.l.b16 %v139
    %v264 = vunpack.c.l.b16 %v140
    %v265 = vunpack.c.l.b16 %v141
    %v266 = vunpack.c.l.b16 %v142
    %v267 = vunpack.c.l.b16 %v143
    %v268 = vunpack.c.l.b16 %v144
    %v269 = vunpack.c.l.b16 %v145
    %v270 = vunpack.c.l.b16 %v146
    %v271 = vunpack.c.l.b16 %v147
    %v272 = vunpack.c.l.b16 %v148
    %v273 = vunpack.c.l.b16 %v149
    %v274 = vunpack.c.l.b16 %v150
    %v275 = vunpack.c.l.b16 %v151
    %v276 = vunpack.c.l.b16 %v152
    %v277 = vunpack.c.l.b16 %v153
    %v278 = vunpack.c.l.b16 %v154
    %v279 = vunpack.c.l.b16 %v155
    %v280 = vunpack.c.l.b16 %v156
    %v281 = vunpack.c.l.b16 %v157
    %v282 = vunpack.c.l.b16 %v158
    %v283 = vunpack.c.l.b16 %v159
    %v284 = vunpack.c.l.b16 %v160
    %v285 = vunpack.c.l.b16 %v161
    %v286 = vunpack.c.l.b16 %v162
    %v287 = vunpack.c.l.b16 %v163
    %v288 = vunpack.c.l.b16 %v164
    %v289 = vunpack.c.l.b16 %v165
    %v290 = vunpack.c.l.b16 %v166
    %v291 = vunpack.c.l.b16 %v167
    %v292 = vpack.c.b16 %v245, %v244
    %v293 = vpack.c.b16 %v247, %v246
    %v294 = vpack.c.b16 %v249, %v248
    %v295 = vpack.c.b16 %v251, %v250
    %v296 = vpack.c.b16 %v253, %v252
    %v297 = vpack.c.b16 %v255, %v254
    %v298 = vpack.c.b16 %v257, %v256
    %v299 = vpack.c.b16 %v259, %v258
    %v300 = vpack.c.b16 %v261, %v260
    %v301 = vpack.c.b16 %v263, %v262
    %v302 = vpack.c.b16 %v265, %v264
    %v303 = vpack.c.b16 %v267, %v266
    %v304 = vpack.c.b16 %v269, %v268
    %v305 = vpack.c.b16 %v271, %v270
    %v306 = vpack.c.b16 %v273, %v272
    %v307 = vpack.c.b16 %v275, %v274
    %v308 = vpack.c.b16 %v277, %v276
    %v309 = vpack.c.b16 %v279, %v278
    %v310 = vpack.c.b16 %v281, %v280
    %v311 = vpack.c.b16 %v283, %v282
    %v312 = vpack.c.b16 %v285, %v284
    %v313 = vpack.c.b16 %v287, %v286
    %v314 = vpack.c.b16 %v289, %v288
    %v315 = vpack.c.b16 %v291, %v290
    %340 = vmatpush.bf16.msra.mxu0 %v299
    %341 = vmatpush.bf16.msra.mxu0 %v298
    %342 = vmatpush.bf16.msra.mxu0 %v297
    %343 = vmatpush.bf16.msra.mxu0 %v296
    %344 = vmatpush.bf16.msra.mxu0 %v295
    %345 = vmatpush.bf16.msra.mxu0 %v294
    %346 = vmatpush.bf16.msra.mxu0 %v293
    %347 = vmatpush.bf16.msra.mxu0 %v292
    %348 = vmatmul.bf16.gmra.mxu0 %v190
    %v349 = vpop.f32.mrf.mxu0
    %v350 = vadd.f32 %v194, %v349
    %v351 = vpop.f32.mrf.mxu0
    %v352 = vadd.f32 %v194, %v351
    %353 = vdwg.mxu0
    %354 = vmatpush.bf16.msra.mxu0 %v307
    %355 = vmatpush.bf16.msra.mxu0 %v306
    %356 = vmatpush.bf16.msra.mxu0 %v305
    %357 = vmatpush.bf16.msra.mxu0 %v304
    %358 = vmatpush.bf16.msra.mxu0 %v303
    %359 = vmatpush.bf16.msra.mxu0 %v302
    %360 = vmatpush.bf16.msra.mxu0 %v301
    %361 = vmatpush.bf16.msra.mxu0 %v300
    %362 = vmatmul.bf16.gmra.mxu0 %v191
    %v363 = vpop.f32.mrf.mxu0
    %v364 = vadd.f32 %v350, %v363
    %v365 = vpop.f32.mrf.mxu0
    %v366 = vadd.f32 %v352, %v365
    %367 = vdwg.mxu0
    %368 = vmatpush.bf16.msra.mxu0 %v315
    %369 = vmatpush.bf16.msra.mxu0 %v314
    %370 = vmatpush.bf16.msra.mxu0 %v313
    %371 = vmatpush.bf16.msra.mxu0 %v312
    %372 = vmatpush.bf16.msra.mxu0 %v311
    %373 = vmatpush.bf16.msra.mxu0 %v310
    %374 = vmatpush.bf16.msra.mxu0 %v309
    %375 = vmatpush.bf16.msra.mxu0 %v308
    %376 = vmatmul.bf16.gmra.mxu0 %v192
    %v377 = vpop.f32.mrf.mxu0
    %v378 = vadd.f32 %v364, %v377
    %v379 = vpop.f32.mrf.mxu0
    %v380 = vadd.f32 %v366, %v379
    %381 = vdwg.mxu0
    %v382 = vld [vmem:[%s3] sm:$0x1]
    %v383 = vld [vmem:[%s4] sm:$0x1]
    %v384 = vadd.f32 %v378, %v380
    %v385 = vrot.slane %v384, 4
    %v386 = vadd.f32 %v384, %v385
    %v387 = vrot.slane %v386, 2
    %v388 = vadd.f32 %v386, %v387
    %v389 = vrot.slane %v388, 1
    %v390 = vadd.f32 %v388, %v389
    %v391 = vrcp.pop 16.0
    %v392 = vmul.f32 16.0, %v391
    %v393 = vsub.f32 1.0, %v392
    %v394 = vmul.f32 %v391, %v393
    %v395 = vadd.f32 %v391, %v394
    %vm396 = vweird.f32 %v391
    %v397 = vsel %vm396, %v391, %v395
    %v398 = vmul.f32 %v390, %v397
    %v399 = vsub.f32 %v378, %v398
    %v400 = vsub.f32 %v380, %v398
    %v401 = vmul.f32 %v399, %v399
    %v402 = vmul.f32 %v400, %v400
    %v403 = vadd.f32 %v401, %v402
    %v404 = vrot.slane %v403, 4
    %v405 = vadd.f32 %v403, %v404
    %v406 = vrot.slane %v405, 2
    %v407 = vadd.f32 %v405, %v406
    %v408 = vrot.slane %v407, 1
    %v409 = vadd.f32 %v407, %v408
    %v410 = vmul.f32 %v409, %v397
    %v411 = vadd.f32 %v410, 1e-05
    %v412 = vrsqrt.pop %v411
    %v413 = vmul.f32 %v412, %v411
    %v414 = vmul.f32 %v413, %v412
    %v415 = vmul.f32 0.5, %v414
    %v416 = vsub.f32 1.5, %v415
    %v417 = vmul.f32 %v412, %v416
    %vm418 = vweird.f32 %v411
    %vm419 = vweird.f32 %v412
    %vm420 = vmor %vm418, %vm419
    %v421 = vsel %vm420, %v412, %v417
    %v422 = vmul.f32 %v399, %v421
    %v423 = vmul.f32 %v400, %v421
    %v425 = vperm.slane %v382, 0
    %v427 = vmul.f32 %v422, %v425
    %v428 = vmul.f32 %v423, %v425
    %v430 = vperm.slane %v383, 0
    %v432 = vadd.f32 %v427, %v430
    %v433 = vadd.f32 %v428, %v430
    %v434 = vmax.f32 %v432, 0.0
    %v435 = vmax.f32 %v433, 0.0
    %v436 = vld [vmem:[%s6] sm:$0x1]
    %v437 = vld [vmem:[#allocation7] sm:$0xf]
    %v438 = vld [vmem:[#allocation7 + $0x4] sm:$0xf]
    %v439 = vld [vmem:[#allocation7 + $0x8] sm:$0xf]
    %v440 = vld [vmem:[#allocation7 + $0xc] sm:$0xf]
    %v441 = vld [vmem:[#allocation7 + $0x10] sm:$0xf]
    %v442 = vld [vmem:[#allocation7 + $0x14] sm:$0xf]
    %v443 = vld [vmem:[#allocation7 + $0x18] sm:$0xf]
    %v444 = vld [vmem:[#allocation7 + $0x1c] sm:$0xf]
    %v445 = vld [vmem:[#allocation7 + $0x20] sm:$0xf]
    %v446 = vld [vmem:[#allocation7 + $0x24] sm:$0xf]
    %v447 = vld [vmem:[#allocation7 + $0x28] sm:$0xf]
    %v448 = vld [vmem:[#allocation7 + $0x2c] sm:$0xf]
    %v449 = vld [vmem:[#allocation7 + $0x30] sm:$0xf]
    %v450 = vld [vmem:[#allocation7 + $0x34] sm:$0xf]
    %v451 = vld [vmem:[#allocation7 + $0x38] sm:$0xf]
    %v452 = vld [vmem:[#allocation7 + $0x3c] sm:$0xf]
    %v453 = vld [vmem:[#allocation7 + $0x40] sm:$0xf]
    %v454 = vld [vmem:[#allocation7 + $0x44] sm:$0xf]
    %v455 = vld [vmem:[#allocation7 + $0x48] sm:$0xf]
    %v456 = vld [vmem:[#allocation7 + $0x4c] sm:$0xf]
    %v457 = vld [vmem:[#allocation7 + $0x50] sm:$0xf]
    %v458 = vld [vmem:[#allocation7 + $0x54] sm:$0xf]
    %v459 = vld [vmem:[#allocation7 + $0x58] sm:$0xf]
    %v460 = vld [vmem:[#allocation7 + $0x5c] sm:$0xf]
    %v461 = vld [vmem:[#allocation7 + $0x60] sm:$0xf]
    %v462 = vld [vmem:[#allocation7 + $0x64] sm:$0xf]
    %v463 = vld [vmem:[#allocation7 + $0x68] sm:$0xf]
    %v464 = vld [vmem:[#allocation7 + $0x6c] sm:$0xf]
    %v465 = vld [vmem:[#allocation7 + $0x70] sm:$0xf]
    %v466 = vld [vmem:[#allocation7 + $0x74] sm:$0xf]
    %v467 = vld [vmem:[#allocation7 + $0x78] sm:$0xf]
    %v468 = vld [vmem:[#allocation7 + $0x7c] sm:$0xf]
    %v469 = vld [vmem:[#allocation7 + $0x80] sm:$0xf]
    %v470 = vld [vmem:[#allocation7 + $0x84] sm:$0xf]
    %v471 = vld [vmem:[#allocation7 + $0x88] sm:$0xf]
    %v472 = vld [vmem:[#allocation7 + $0x8c] sm:$0xf]
    %v473 = vld [vmem:[#allocation7 + $0x90] sm:$0xf]
    %v474 = vld [vmem:[#allocation7 + $0x94] sm:$0xf]
    %v475 = vld [vmem:[#allocation7 + $0x98] sm:$0xf]
    %v476 = vld [vmem:[#allocation7 + $0x9c] sm:$0xf]
    %v477 = vld [vmem:[#allocation7 + $0xa0] sm:$0xf]
    %v478 = vld [vmem:[#allocation7 + $0xa4] sm:$0xf]
    %v479 = vld [vmem:[#allocation7 + $0xa8] sm:$0xf]
    %v480 = vld [vmem:[#allocation7 + $0xac] sm:$0xf]
    %v481 = vld [vmem:[#allocation7 + $0xb0] sm:$0xf]
    %v482 = vld [vmem:[#allocation7 + $0xb4] sm:$0xf]
    %v483 = vld [vmem:[#allocation7 + $0xb8] sm:$0xf]
    %v484 = vld [vmem:[#allocation7 + $0xbc] sm:$0xf]
    %v485 = vrot.slane %v434, 7
    %v486 = vrot.slane %v435, 7
    %v487 = vsel %vm170, %v485, %v486
    %v488 = vsel %vm170, %v486, %v485
    %v489 = vsel %vm175, 0.0, %v488
    %v490 = vsel %vm176, 0.0, %v487
    %v491 = vrot.slane %v434, 1
    %v492 = vrot.slane %v435, 1
    %v493 = vsel %vm181, %v491, %v492
    %v494 = vsel %vm181, %v492, %v491
    %v495 = vsel %vm186, 0.0, %v493
    %v496 = vsel %vm187, 0.0, %v494
    %v497 = vpack.c.bf16 %v490, %v489
    %v498 = vpack.c.bf16 %v435, %v434
    %v499 = vpack.c.bf16 %v496, %v495
    %v501 = vperm.slane %v436, 0
    %v551 = vunpack.c.l.b16 %v437
    %v552 = vunpack.c.l.b16 %v438
    %v553 = vunpack.c.l.b16 %v439
    %v554 = vunpack.c.l.b16 %v440
    %v555 = vunpack.c.l.b16 %v441
    %v556 = vunpack.c.l.b16 %v442
    %v557 = vunpack.c.l.b16 %v443
    %v558 = vunpack.c.l.b16 %v444
    %v559 = vunpack.c.l.b16 %v445
    %v560 = vunpack.c.l.b16 %v446
    %v561 = vunpack.c.l.b16 %v447
    %v562 = vunpack.c.l.b16 %v448
    %v563 = vunpack.c.l.b16 %v449
    %v564 = vunpack.c.l.b16 %v450
    %v565 = vunpack.c.l.b16 %v451
    %v566 = vunpack.c.l.b16 %v452
    %v567 = vunpack.c.l.b16 %v453
    %v568 = vunpack.c.l.b16 %v454
    %v569 = vunpack.c.l.b16 %v455
    %v570 = vunpack.c.l.b16 %v456
    %v571 = vunpack.c.l.b16 %v457
    %v572 = vunpack.c.l.b16 %v458
    %v573 = vunpack.c.l.b16 %v459
    %v574 = vunpack.c.l.b16 %v460
    %v575 = vunpack.c.l.b16 %v461
    %v576 = vunpack.c.l.b16 %v462
    %v577 = vunpack.c.l.b16 %v463
    %v578 = vunpack.c.l.b16 %v464
    %v579 = vunpack.c.l.b16 %v465
    %v580 = vunpack.c.l.b16 %v466
    %v581 = vunpack.c.l.b16 %v467
    %v582 = vunpack.c.l.b16 %v468
    %v583 = vunpack.c.l.b16 %v469
    %v584 = vunpack.c.l.b16 %v470
    %v585 = vunpack.c.l.b16 %v471
    %v586 = vunpack.c.l.b16 %v472
    %v587 = vunpack.c.l.b16 %v473
    %v588 = vunpack.c.l.b16 %v474
    %v589 = vunpack.c.l.b16 %v475
    %v590 = vunpack.c.l.b16 %v476
    %v591 = vunpack.c.l.b16 %v477
    %v592 = vunpack.c.l.b16 %v478
    %v593 = vunpack.c.l.b16 %v479
    %v594 = vunpack.c.l.b16 %v480
    %v595 = vunpack.c.l.b16 %v481
    %v596 = vunpack.c.l.b16 %v482
    %v597 = vunpack.c.l.b16 %v483
    %v598 = vunpack.c.l.b16 %v484
    %v599 = vpack.c.b16 %v552, %v551
    %v600 = vpack.c.b16 %v554, %v553
    %v601 = vpack.c.b16 %v556, %v555
    %v602 = vpack.c.b16 %v558, %v557
    %v603 = vpack.c.b16 %v560, %v559
    %v604 = vpack.c.b16 %v562, %v561
    %v605 = vpack.c.b16 %v564, %v563
    %v606 = vpack.c.b16 %v566, %v565
    %v607 = vpack.c.b16 %v568, %v567
    %v608 = vpack.c.b16 %v570, %v569
    %v609 = vpack.c.b16 %v572, %v571
    %v610 = vpack.c.b16 %v574, %v573
    %v611 = vpack.c.b16 %v576, %v575
    %v612 = vpack.c.b16 %v578, %v577
    %v613 = vpack.c.b16 %v580, %v579
    %v614 = vpack.c.b16 %v582, %v581
    %v615 = vpack.c.b16 %v584, %v583
    %v616 = vpack.c.b16 %v586, %v585
    %v617 = vpack.c.b16 %v588, %v587
    %v618 = vpack.c.b16 %v590, %v589
    %v619 = vpack.c.b16 %v592, %v591
    %v620 = vpack.c.b16 %v594, %v593
    %v621 = vpack.c.b16 %v596, %v595
    %v622 = vpack.c.b16 %v598, %v597
    %647 = vmatpush.bf16.msra.mxu0 %v606
    %648 = vmatpush.bf16.msra.mxu0 %v605
    %649 = vmatpush.bf16.msra.mxu0 %v604
    %650 = vmatpush.bf16.msra.mxu0 %v603
    %651 = vmatpush.bf16.msra.mxu0 %v602
    %652 = vmatpush.bf16.msra.mxu0 %v601
    %653 = vmatpush.bf16.msra.mxu0 %v600
    %654 = vmatpush.bf16.msra.mxu0 %v599
    %655 = vmatmul.bf16.gmra.mxu0 %v497
    %v656 = vpop.f32.mrf.mxu0
    %v657 = vadd.f32 %v501, %v656
    %v658 = vpop.f32.mrf.mxu0
    %v659 = vadd.f32 %v501, %v658
    %660 = vdwg.mxu0
    %661 = vmatpush.bf16.msra.mxu0 %v614
    %662 = vmatpush.bf16.msra.mxu0 %v613
    %663 = vmatpush.bf16.msra.mxu0 %v612
    %664 = vmatpush.bf16.msra.mxu0 %v611
    %665 = vmatpush.bf16.msra.mxu0 %v610
    %666 = vmatpush.bf16.msra.mxu0 %v609
    %667 = vmatpush.bf16.msra.mxu0 %v608
    %668 = vmatpush.bf16.msra.mxu0 %v607
    %669 = vmatmul.bf16.gmra.mxu0 %v498
    %v670 = vpop.f32.mrf.mxu0
    %v671 = vadd.f32 %v657, %v670
    %v672 = vpop.f32.mrf.mxu0
    %v673 = vadd.f32 %v659, %v672
    %674 = vdwg.mxu0
    %675 = vmatpush.bf16.msra.mxu0 %v622
    %676 = vmatpush.bf16.msra.mxu0 %v621
    %677 = vmatpush.bf16.msra.mxu0 %v620
    %678 = vmatpush.bf16.msra.mxu0 %v619
    %679 = vmatpush.bf16.msra.mxu0 %v618
    %680 = vmatpush.bf16.msra.mxu0 %v617
    %681 = vmatpush.bf16.msra.mxu0 %v616
    %682 = vmatpush.bf16.msra.mxu0 %v615
    %683 = vmatmul.bf16.gmra.mxu0 %v499
    %v684 = vpop.f32.mrf.mxu0
    %v685 = vadd.f32 %v671, %v684
    %v686 = vpop.f32.mrf.mxu0
    %v687 = vadd.f32 %v673, %v686
    %688 = vdwg.mxu0
    %v689 = vld [vmem:[%s7] sm:$0x1]
    %v690 = vld [vmem:[%s8] sm:$0x1]
    %v691 = vadd.f32 %v685, %v687
    %v692 = vrot.slane %v691, 4
    %v693 = vadd.f32 %v691, %v692
    %v694 = vrot.slane %v693, 2
    %v695 = vadd.f32 %v693, %v694
    %v696 = vrot.slane %v695, 1
    %v697 = vadd.f32 %v695, %v696
    %v698 = vmul.f32 %v697, %v397
    %v699 = vsub.f32 %v685, %v698
    %v700 = vsub.f32 %v687, %v698
    %v701 = vmul.f32 %v699, %v699
    %v702 = vmul.f32 %v700, %v700
    %v703 = vadd.f32 %v701, %v702
    %v704 = vrot.slane %v703, 4
    %v705 = vadd.f32 %v703, %v704
    %v706 = vrot.slane %v705, 2
    %v707 = vadd.f32 %v705, %v706
    %v708 = vrot.slane %v707, 1
    %v709 = vadd.f32 %v707, %v708
    %v710 = vmul.f32 %v709, %v397
    %v711 = vadd.f32 %v710, 1e-05
    %v712 = vrsqrt.pop %v711
    %v713 = vmul.f32 %v712, %v711
    %v714 = vmul.f32 %v713, %v712
    %v715 = vmul.f32 0.5, %v714
    %v716 = vsub.f32 1.5, %v715
    %v717 = vmul.f32 %v712, %v716
    %vm718 = vweird.f32 %v711
    %vm719 = vweird.f32 %v712
    %vm720 = vmor %vm718, %vm719
    %v721 = vsel %vm720, %v712, %v717
    %v722 = vmul.f32 %v699, %v721
    %v723 = vmul.f32 %v700, %v721
    %v725 = vperm.slane %v689, 0
    %v727 = vmul.f32 %v722, %v725
    %v728 = vmul.f32 %v723, %v725
    %v730 = vperm.slane %v690, 0
    %v732 = vadd.f32 %v727, %v730
    %v733 = vadd.f32 %v728, %v730
    %v734 = vmax.f32 %v732, 0.0
    %v735 = vmax.f32 %v733, 0.0
    %736 = vst [vmem:[#allocation8] sm:$0xff] %v734
    %737 = vst [vmem:[#allocation8 + $0x8] sm:$0xff] %v735
    // Predicated region
    $region50: #{tpu_custom_call.1} parent=1 // pred_check
      _
    $region51: #{tpu_custom_call.1} parent=1 // pred_check_branch
      %739 = sbr.rel (0) target = $region53
    $region52: #{tpu_custom_call.1} parent=1 // pred_region
      %741 = vsyncadd [#allocation4], 0
      %s742 = sshll.u32 [#allocation8], 4
      %s743 = int_to_ptr.vmem [resolvable:$true] %s742
      %s744 = sshll.u32 %s9, 4
      %s745 = int_to_ptr.hbm [resolvable:$true] %s744
      %750 = dma.vmem_to_hbm [thread:$0]  %s743, 256, %s745, [#allocation4], 128, 128, 8
    $region53: #{tpu_custom_call.1} parent=1 // pred_fallthru
      _
    // Predicated region
    $region54: #{tpu_custom_call.1} parent=1 // pred_check
      _
    $region55: #{tpu_custom_call.1} parent=1 // pred_check_branch
      %752 = sbr.rel (0) target = $region57
    $region56: #{tpu_custom_call.1} parent=1 // pred_region
      %754 = dma.done [#allocation4], 256
    $region57: #{tpu_custom_call.1} parent=1 // pred_fallthru
      _
    %755 = vsyncpa [#allocation3], 1
    %756 = vsyncpa [#allocation6], 1
    %757 = vsyncpa [#allocation4], 1

</llo_original>
